<compile_context>
chip_gen: v5e
topology: v5e:2x2
jax: 0.10.0
libtpu: 0.0.40
codegen_flags: <defaults>
</compile_context>

<pallas_src>
import functools

import jax
import jax.numpy as jnp
from jax import lax
from jax.experimental import pallas as pl
from jax.experimental.pallas import tpu as pltpu


# ---------------------------------------------------------------------------
# Fused kernel: per grid step pools one batch tile (gather + mask + mean +
# folded pooler projection + tanh) into a VMEM scratch; the last step runs the
# in-batch ranking (logits + CE loss) entirely in VMEM.
# ---------------------------------------------------------------------------
def _fused_kernel(ids_ref, embw_ref, b_ref, logits_ref, loss_ref, pooled_ref,
                  *, batch, b_pad):
    i = pl.program_id(0)
    tb, seq = ids_ref.shape
    v = embw_ref.shape[0]

    ids = ids_ref[...]                              # [TB, S] int32
    valid = ids > 0                                 # attention mask, in-kernel
    cnt = jnp.sum(valid.astype(jnp.float32), axis=1, keepdims=True)   # [TB,1]
    ids_m = jnp.where(valid, ids, -1)               # pad never matches a vocab id

    # Token-count histogram counts[b, v] = #{s : ids[b, s] == v, v > 0}.
    # Chunked over S so the live one-hot slab stays small at large TB.
    counts = jnp.zeros((tb, v), jnp.float32)
    cs = min(8, seq)
    for s0 in range(0, seq, cs):
        chunk = ids_m[:, s0:s0 + cs]                                  # [TB,<=cs]
        vocab = lax.broadcasted_iota(jnp.int32, chunk.shape + (v,), 2)
        hit = (chunk[:, :, None] == vocab).astype(jnp.float32)
        counts = counts + jnp.sum(hit, axis=1)

    # masked sum + pooler projection in ONE MXU matmul (embW = emb @ W is
    # pre-folded).  counts are exact small ints -> safe as bf16 at these S.
    summed = jnp.dot(counts.astype(jnp.bfloat16), embw_ref[...],
                     preferred_element_type=jnp.float32)              # [TB, H]
    inv = pl.reciprocal(jnp.maximum(cnt, 1.0), approx=True)           # EUP slot
    pooled_tile = jnp.tanh(summed * inv + b_ref[...])

    base = pl.multiple_of(i * tb, 8)
    pooled_ref[pl.ds(base, tb), :] = pooled_tile

    # ---- ranking epilogue: runs once; pooled never leaves VMEM -------------
    @pl.when(i == pl.num_programs(0) - 1)
    def _():
        pooled = pooled_ref[...]                                      # [2*B_pad, H]
        c = pooled[:b_pad].astype(jnp.bfloat16)
        r = pooled[b_pad:].astype(jnp.bfloat16)

        # C @ R^T via contraction ((1,),(1,)) -> MXU, no XLU transpose.
        logits = lax.dot_general(c, r, (((1,), (1,)), ((), ())),
                                 preferred_element_type=jnp.float32)  # [Bp, Bp]

        # CrossEntropy(labels=arange(B)): diagonal as row-wise dot products.
        diag = jnp.sum(c.astype(jnp.float32) * r.astype(jnp.float32),
                       axis=1, keepdims=True)                         # [Bp, 1]

        if b_pad != batch:   # mask padded response columns (pooled=tanh(b)!=0)
            col = lax.broadcasted_iota(jnp.int32, (b_pad, b_pad), 1)
            lmask = jnp.where(col < batch, logits, -jnp.inf)
        else:
            lmask = logits
        m = jnp.max(lmask, axis=1, keepdims=True)
        lse = m + jnp.log(jnp.sum(jnp.exp(lmask - m), axis=1, keepdims=True))
        per_row = lse - diag
        if b_pad != batch:   # drop padded context rows from the mean
            row = lax.broadcasted_iota(jnp.int32, (b_pad, 1), 0)
            per_row = jnp.where(row < batch, per_row, 0.0)

        loss_ref[0, 0] = jnp.sum(per_row) / jnp.float32(batch)
        logits_ref[...] = logits if b_pad == batch else logits[:batch, :batch]


def _choose_tb(total_rows):
    """Largest multiple-of-8 batch tile <= 256 that divides total_rows."""
    for tb in (256, 128, 64, 32, 16, 8):
        if tb <= total_rows and total_rows % tb == 0:
            return tb
    return total_rows


# ---------------------------------------------------------------------------
# dual_encoder_ranking.forward (eval-path semantics, no optimizer step)
# ---------------------------------------------------------------------------
def dual_encoder_forward(params, context_ids, response_ids):
    """context_ids / response_ids: int32 [B, S] token ids (0 == pad)."""
    batch, seq = context_ids.shape
    b_pad = ((batch + 7) // 8) * 8
    if b_pad != batch:
        zpad = jnp.zeros((b_pad - batch, seq), context_ids.dtype)
        context_ids = jnp.concatenate([context_ids, zpad], axis=0)
        response_ids = jnp.concatenate([response_ids, zpad], axis=0)
    # Both encoder passes in ONE launch: stack context + response rows.
    ids = jnp.concatenate([context_ids, response_ids], axis=0)        # [2Bp, S]

    # Pre-fold the pooler projection into the (meta-averaged) embedding table:
    # tanh(mean(E[ids]) @ W + b) == tanh((counts @ (E @ W)) / cnt + b).
    embw = jnp.dot(params["emb_table"], params["pooler_w"]).astype(jnp.bfloat16)
    bias = params["pooler_b"].astype(jnp.float32).reshape(1, -1)

    total = 2 * b_pad
    tb = _choose_tb(total)
    v, h = embw.shape

    logits, loss = pl.pallas_call(
        functools.partial(_fused_kernel, batch=batch, b_pad=b_pad),
        out_shape=(
            jax.ShapeDtypeStruct((batch, batch), jnp.float32),
            jax.ShapeDtypeStruct((1, 1), jnp.float32),
        ),
        grid=(total // tb,),
        in_specs=[
            pl.BlockSpec((tb, seq), lambda i: (i, 0)),
            pl.BlockSpec((v, h), lambda i: (0, 0)),
            pl.BlockSpec((1, h), lambda i: (0, 0)),
        ],
        out_specs=(
            pl.BlockSpec((batch, batch), lambda i: (0, 0)),
            pl.BlockSpec(memory_space=pltpu.MemorySpace.SMEM),
        ),
        scratch_shapes=[pltpu.VMEM((total, h), jnp.float32)],
        # scratch accumulation + last-step epilogue => reduction-like axis.
        compiler_params=pltpu.CompilerParams(
            dimension_semantics=("arbitrary",)),
    )(ids, embw, bias)

    # Original uses np.argsort (ascending); evaluation() takes preds[:, -k:],
    # so ascending order matches the reference semantics.
    predictions = jnp.argsort(logits, axis=1)
    labels = jnp.arange(batch)
    # TODO(synk): eval-path padding with the cached self.final_response_output
    # (stateful across forward calls) is not reproduced.
    return {"loss": loss[0, 0], "pred": predictions, "label": labels,
            "logits": logits}


def init_params(key, vocab=128, hidden=128):
    k1, k2, k3, k4 = jax.random.split(key, 4)
    # BertMetaEmbed with use_average=True: average of the embedding tables.
    emb1 = jax.random.normal(k1, (vocab, hidden), jnp.float32) * 0.5
    emb2 = jax.random.normal(k2, (vocab, hidden), jnp.float32) * 0.5
    emb_table = 0.5 * (emb1 + emb2)
    pooler_w = jax.random.normal(k3, (hidden, hidden), jnp.float32) * 0.1
    pooler_b = jax.random.normal(k4, (1, hidden), jnp.float32) * 0.01
    return {"emb_table": emb_table, "pooler_w": pooler_w, "pooler_b": pooler_b}


# ---------------------------------------------------------------------------
# Pure-JAX f32 reference (original semantics) for a sanity check.
# ---------------------------------------------------------------------------
def ref_forward(params, context_ids, response_ids):
    emb, w, b = params["emb_table"], params["pooler_w"], params["pooler_b"]

    def encode(ids):
        mask = (ids > 0).astype(jnp.float32)
        e = jnp.take(emb, ids, axis=0)
        summed = (e * mask[:, :, None]).sum(1)
        mean = summed / jnp.maximum(mask.sum(1, keepdims=True), 1.0)
        return jnp.tanh(mean @ w + b)

    c = encode(context_ids)
    r = encode(response_ids)
    logits = c @ r.T
    lse = jax.scipy.special.logsumexp(logits, axis=1)
    loss = jnp.mean(lse - jnp.diag(logits))
    return logits, loss


if __name__ == "__main__":
    key = jax.random.PRNGKey(0)
    B, S, H, V = 8, 16, 128, 128

    params = init_params(key, vocab=V, hidden=H)
    kc, kr = jax.random.split(jax.random.fold_in(key, 1))
    context_ids = jax.random.randint(kc, (B, S), 0, V, dtype=jnp.int32)
    response_ids = jax.random.randint(kr, (B, S), 0, V, dtype=jnp.int32)

    out = dual_encoder_forward(params, context_ids, response_ids)
    jax.block_until_ready(out["logits"])
    jax.block_until_ready(out["loss"])

    logits_ref, loss_ref = ref_forward(params, context_ids, response_ids)
    assert jnp.allclose(out["logits"], logits_ref, atol=2e-2, rtol=2e-2), (
        float(jnp.max(jnp.abs(out["logits"] - logits_ref))))
    assert jnp.allclose(out["loss"], loss_ref, atol=2e-2, rtol=2e-2), (
        float(out["loss"]), float(loss_ref))

    print("KERNEL_OK")
</pallas_src>

<mosaic_0001>
module attributes {stable_mosaic.version = 11 : i64} {
  func.func @_fused_kernel(%arg0: i32, %arg1: memref<16x16xi32, #tpu.memory_space<vmem>>, %arg2: memref<128x128xbf16, #tpu.memory_space<vmem>>, %arg3: memref<1x128xf32, #tpu.memory_space<vmem>>, %arg4: memref<8x8xf32, #tpu.memory_space<vmem>>, %arg5: memref<1x1xf32, #tpu.memory_space<smem>>, %arg6: memref<16x128xf32, #tpu.memory_space<vmem>>) attributes {dimension_semantics = [#tpu.dimension_semantics<arbitrary>], iteration_bounds = array<i64: 1>, scalar_prefetch = 0 : i64, scratch_operands = 1 : i64, tpu.core_type = #tpu.core_type<tc>, window_params = [{transform_indices = @transform_0, window_bounds = array<i64: 16, 16>}, {pipeline_mode = #tpu.pipeline_mode<synchronous>, transform_indices = @transform_1, window_bounds = array<i64: 128, 128>}, {pipeline_mode = #tpu.pipeline_mode<synchronous>, transform_indices = @transform_2, window_bounds = array<i64: 1, 128>}, {pipeline_mode = #tpu.pipeline_mode<synchronous>, transform_indices = @transform_3, window_bounds = array<i64: 8, 8>}, {transform_indices = @transform_4, window_bounds = array<i64: 1, 1>}]} {
    %c0 = arith.constant 0 : index
    %c0_0 = arith.constant 0 : index
    %0 = vector.load %arg1[%c0, %c0_0] : memref<16x16xi32, #tpu.memory_space<vmem>>, vector<16x16xi32>
    %c0_i32 = arith.constant 0 : i32
    %1 = vector.broadcast %c0_i32 : i32 to vector<16x16xi32>
    %2 = arith.cmpi sgt, %0, %1 : vector<16x16xi32>
    %3 = arith.extui %2 : vector<16x16xi1> to vector<16x16xi32>
    %4 = arith.sitofp %3 : vector<16x16xi32> to vector<16x16xf32>
    %cst = arith.constant dense<0.000000e+00> : vector<16xf32>
    %5 = vector.multi_reduction <add>, %4, %cst [1] : vector<16x16xf32> to vector<16xf32>
    %6 = vector.shape_cast %5 : vector<16xf32> to vector<16x1xf32>
    %c-1_i32 = arith.constant -1 : i32
    %7 = vector.broadcast %c-1_i32 : i32 to vector<16x16xi32>
    %8 = arith.select %2, %0, %7 : vector<16x16xi1>, vector<16x16xi32>
    %cst_1 = arith.constant 0.000000e+00 : f32
    %9 = vector.broadcast %cst_1 : f32 to vector<16x128xf32>
    %10 = vector.extract_strided_slice %8 {offsets = [0, 0], sizes = [16, 8], strides = [1, 1]} : vector<16x16xi32> to vector<16x8xi32>
    %11 = tpu.iota {dimensions = array<i32: 2>} : vector<16x8x128xi32>
    %12 = vector.shape_cast %10 : vector<16x8xi32> to vector<16x8x1xi32>
    %13 = vector.broadcast %12 : vector<16x8x1xi32> to vector<16x8x128xi32>
    %14 = arith.cmpi eq, %13, %11 : vector<16x8x128xi32>
    %15 = arith.extui %14 : vector<16x8x128xi1> to vector<16x8x128xi32>
    %16 = arith.sitofp %15 : vector<16x8x128xi32> to vector<16x8x128xf32>
    %cst_2 = arith.constant dense<0.000000e+00> : vector<16x128xf32>
    %17 = vector.multi_reduction <add>, %16, %cst_2 [1] : vector<16x8x128xf32> to vector<16x128xf32>
    %18 = arith.addf %9, %17 : vector<16x128xf32>
    %19 = vector.extract_strided_slice %8 {offsets = [0, 8], sizes = [16, 8], strides = [1, 1]} : vector<16x16xi32> to vector<16x8xi32>
    %20 = tpu.iota {dimensions = array<i32: 2>} : vector<16x8x128xi32>
    %21 = vector.shape_cast %19 : vector<16x8xi32> to vector<16x8x1xi32>
    %22 = vector.broadcast %21 : vector<16x8x1xi32> to vector<16x8x128xi32>
    %23 = arith.cmpi eq, %22, %20 : vector<16x8x128xi32>
    %24 = arith.extui %23 : vector<16x8x128xi1> to vector<16x8x128xi32>
    %25 = arith.sitofp %24 : vector<16x8x128xi32> to vector<16x8x128xf32>
    %cst_3 = arith.constant dense<0.000000e+00> : vector<16x128xf32>
    %26 = vector.multi_reduction <add>, %25, %cst_3 [1] : vector<16x8x128xf32> to vector<16x128xf32>
    %27 = arith.addf %18, %26 : vector<16x128xf32>
    %28 = arith.truncf %27 : vector<16x128xf32> to vector<16x128xbf16>
    %c0_4 = arith.constant 0 : index
    %c0_5 = arith.constant 0 : index
    %29 = vector.load %arg2[%c0_4, %c0_5] : memref<128x128xbf16, #tpu.memory_space<vmem>>, vector<128x128xbf16>
    %cst_6 = arith.constant dense<0.000000e+00> : vector<16x128xf32>
    %30 = tpu.matmul %28, %29, %cst_6 {dimension_numbers = #tpu.dot_dimension_numbers<[1], [0], [0], [1], [0, 0, 1, 1], [], []>} : vector<16x128xbf16>, vector<128x128xbf16>, vector<16x128xf32> -> vector<16x128xf32>
    %cst_7 = arith.constant 1.000000e+00 : f32
    %31 = vector.broadcast %cst_7 : f32 to vector<16x1xf32>
    %32 = arith.maximumf %6, %31 : vector<16x1xf32>
    %33 = tpu.reciprocal %32 {approx = true} : vector<16x1xf32> -> vector<16x1xf32>
    %34 = vector.broadcast %33 : vector<16x1xf32> to vector<16x128xf32>
    %35 = arith.mulf %30, %34 : vector<16x128xf32>
    %c0_8 = arith.constant 0 : index
    %c0_9 = arith.constant 0 : index
    %36 = vector.load %arg3[%c0_8, %c0_9] : memref<1x128xf32, #tpu.memory_space<vmem>>, vector<1x128xf32>
    %37 = vector.broadcast %36 : vector<1x128xf32> to vector<16x128xf32>
    %38 = arith.addf %35, %37 : vector<16x128xf32>
    %39 = math.tanh %38 : vector<16x128xf32>
    %c16_i32 = arith.constant 16 : i32
    %40 = arith.muli %arg0, %c16_i32 : i32
    %41 = tpu.assume_multiple %40, 8 : i32
    %42 = arith.index_cast %41 : i32 to index
    %c0_10 = arith.constant 0 : index
    %43 = vector.load %arg6[%42, %c0_10] : memref<16x128xf32, #tpu.memory_space<vmem>>, vector<16x128xf32>
    tpu.vector_store %arg6[%42, %c0_10], %39 {strides = array<i32>} : memref<16x128xf32, #tpu.memory_space<vmem>>, vector<16x128xf32>,
    %c0_i32_11 = arith.constant 0 : i32
    %44 = arith.cmpi eq, %arg0, %c0_i32_11 : i32
    %45 = arith.extui %44 : i1 to i32
    %c0_i32_12 = arith.constant 0 : i32
    %46 = arith.cmpi ne, %45, %c0_i32_12 : i32
    scf.if %46 {
      %c0_13 = arith.constant 0 : index
      %c0_14 = arith.constant 0 : index
      %47 = vector.load %arg6[%c0_13, %c0_14] : memref<16x128xf32, #tpu.memory_space<vmem>>, vector<16x128xf32>
      %48 = vector.extract_strided_slice %47 {offsets = [0, 0], sizes = [8, 128], strides = [1, 1]} : vector<16x128xf32> to vector<8x128xf32>
      %49 = arith.truncf %48 : vector<8x128xf32> to vector<8x128xbf16>
      %50 = vector.extract_strided_slice %47 {offsets = [8, 0], sizes = [8, 128], strides = [1, 1]} : vector<16x128xf32> to vector<8x128xf32>
      %51 = arith.truncf %50 : vector<8x128xf32> to vector<8x128xbf16>
      %cst_15 = arith.constant dense<0.000000e+00> : vector<8x8xf32>
      %52 = tpu.matmul %49, %51, %cst_15 {dimension_numbers = #tpu.dot_dimension_numbers<[1], [1], [0], [0], [0, 0, 1, 0], [], []>} : vector<8x128xbf16>, vector<8x128xbf16>, vector<8x8xf32> -> vector<8x8xf32>
      %53 = arith.extf %49 : vector<8x128xbf16> to vector<8x128xf32>
      %54 = arith.extf %51 : vector<8x128xbf16> to vector<8x128xf32>
      %55 = arith.mulf %53, %54 : vector<8x128xf32>
      %cst_16 = arith.constant dense<0.000000e+00> : vector<8xf32>
      %56 = vector.multi_reduction <add>, %55, %cst_16 [1] : vector<8x128xf32> to vector<8xf32>
      %57 = vector.shape_cast %56 : vector<8xf32> to vector<8x1xf32>
      %cst_17 = arith.constant dense<0xFF800000> : vector<8xf32>
      %58 = vector.multi_reduction <maximumf>, %52, %cst_17 [1] : vector<8x8xf32> to vector<8xf32>
      %59 = vector.shape_cast %58 : vector<8xf32> to vector<8x1xf32>
      %60 = vector.broadcast %59 : vector<8x1xf32> to vector<8x8xf32>
      %61 = arith.subf %52, %60 : vector<8x8xf32>
      %62 = math.exp %61 : vector<8x8xf32>
      %cst_18 = arith.constant dense<0.000000e+00> : vector<8xf32>
      %63 = vector.multi_reduction <add>, %62, %cst_18 [1] : vector<8x8xf32> to vector<8xf32>
      %64 = vector.shape_cast %63 : vector<8xf32> to vector<8x1xf32>
      %65 = math.log %64 : vector<8x1xf32>
      %66 = arith.addf %59, %65 : vector<8x1xf32>
      %67 = arith.subf %66, %57 : vector<8x1xf32>
      %68 = vector.shape_cast %67 : vector<8x1xf32> to vector<1x8x1xf32>
      %cst_19 = arith.constant dense<0.000000e+00> : vector<1xf32>
      %69 = vector.multi_reduction <add>, %68, %cst_19 [1, 2] : vector<1x8x1xf32> to vector<1xf32>
      %70 = vector.shape_cast %69 : vector<1xf32> to vector<1x1x1xf32>
      %71 = vector.extract %70[0, 0, 0] : f32 from vector<1x1x1xf32>
      %cst_20 = arith.constant 8.000000e+00 : f32
      %72 = arith.divf %71, %cst_20 : f32
      %c0_21 = arith.constant 0 : index
      %c0_22 = arith.constant 0 : index
      %73 = memref.load %arg5[%c0_21, %c0_22] : memref<1x1xf32, #tpu.memory_space<smem>>
      memref.store %72, %arg5[%c0_21, %c0_22] : memref<1x1xf32, #tpu.memory_space<smem>>
      %c0_23 = arith.constant 0 : index
      %c0_24 = arith.constant 0 : index
      %74 = vector.load %arg4[%c0_23, %c0_24] : memref<8x8xf32, #tpu.memory_space<vmem>>, vector<8x8xf32>
      tpu.vector_store %arg4[%c0_23, %c0_24], %52 {strides = array<i32>} : memref<8x8xf32, #tpu.memory_space<vmem>>, vector<8x8xf32>,
    } else {
    }
    return
  }
  func.func @transform_0(%arg0: i32) -> (i32, i32) {
    %c0_i32 = arith.constant 0 : i32
    %c0_i32_0 = arith.constant 0 : i32
    return %arg0, %c0_i32 : i32, i32
  }
  func.func @transform_1(%arg0: i32) -> (i32, i32) {
    %c0_i32 = arith.constant 0 : i32
    %c0_i32_0 = arith.constant 0 : i32
    %c0_i32_1 = arith.constant 0 : i32
    return %c0_i32, %c0_i32_0 : i32, i32
  }
  func.func @transform_2(%arg0: i32) -> (i32, i32) {
    %c0_i32 = arith.constant 0 : i32
    %c0_i32_0 = arith.constant 0 : i32
    %c0_i32_1 = arith.constant 0 : i32
    return %c0_i32, %c0_i32_0 : i32, i32
  }
  func.func @transform_3(%arg0: i32) -> (i32, i32) {
    %c0_i32 = arith.constant 0 : i32
    %c0_i32_0 = arith.constant 0 : i32
    %c0_i32_1 = arith.constant 0 : i32
    return %c0_i32, %c0_i32_0 : i32, i32
  }
  func.func @transform_4(%arg0: i32) -> (i32, i32) {
    %c0_i32 = arith.constant 0 : i32
    %c0_i32_0 = arith.constant 0 : i32
    %c0_i32_1 = arith.constant 0 : i32
    return %c0_i32, %c0_i32_0 : i32, i32
  }
}

</mosaic_0001>

<llo_original>
// kernel: tpu_custom_call.1
$region0: #{tpu_custom_call.1}
  #allocation0 [shape = 'u32[]', space=smem, size = 0x4, offset = 0x4, fixed_abs, tag = 'smem constant byte address 0x4 - core index']
  #allocation1 [shape = 'u32[72,128]{1,0:T(1,128)}', space=vmem, size = 0x9000, scoped, tag = 'internal scratch']
  #allocation2 [shape = 'f32[16,128]{1,0:T(8,128)}', space=vmem, size = 0x2000, scoped, tag = 'scratch operand']
  %s0 = inlined_call_operand.hbm [shape: s32[16,16], index: 0, kind: input, shape index: {}]
  %s1 = inlined_call_operand.hbm [shape: bf16[128,128], index: 1, kind: input, shape index: {}]
  %s2 = inlined_call_operand.vmem [shape: f32[1,128], index: 2, kind: input, shape index: {}]
  %s3 = inlined_call_operand.hbm [shape: f32[8,8], index: 3, kind: output, shape index: {0}]
  %s4 = inlined_call_operand.hbm [shape: f32[1,1], index: 4, kind: output, shape index: {1}]
  %5 = xla_tuple %s3, %s4
  %s6 = sld [smem:[#allocation0]]
  $region42: #{tpu_custom_call.1} parent=0
    _
  %s8 = ssub.s32 1, %s6
  %s9 = scalar_select 0, %s8, %s6
  $region1: #{tpu_custom_call.1} parent=0
    #allocation3 [shape = 'u8[8192]{0}', space=vmem, size = 0x2000, scoped, tag = 'input window, operand 0, single buffered']
    #allocation4 [shape = 's32[1]{0}', space=sflag, size = 0x4, scoped, tag = 'scoped memory for tpu_custom_call.1']
    #allocation5 [shape = 's32[1]{0}', space=sflag, size = 0x4, scoped, tag = 'scoped memory for tpu_custom_call.1']
    #allocation6 [shape = 's32[1]{0}', space=sflag, size = 0x4, scoped, tag = 'scoped memory for tpu_custom_call.1']
    #allocation7 [shape = 'u8[32768]{0}', space=vmem, size = 0x8000, scoped, tag = 'input window, operand 1, single buffered']
    #allocation8 [shape = 's32[1]{0}', space=sflag, size = 0x4, scoped, tag = 'scoped memory for tpu_custom_call.1']
    #allocation9 [shape = 'u8[4096]{0}', space=vmem, size = 0x1000, scoped, tag = 'output window, operand 0, single buffered']
    #allocation10 [shape = 'u8[512]{0}', space=smem, size = 0x200, scoped, tag = 'output window, operand 1, single buffered']
    %10 = vsyncpa [#allocation4], 0
    %11 = vsyncpa [#allocation8], 0
    %12 = vsyncpa [#allocation5], 0
    %13 = vsyncpa [#allocation6], 0
    // Predicated region
    $region2: #{tpu_custom_call.1} parent=1 // pred_check
      _
    $region3: #{tpu_custom_call.1} parent=1 // pred_check_branch
      %15 = sbr.rel (0) target = $region5
    $region4: #{tpu_custom_call.1} parent=1 // pred_region
      %17 = vsyncadd [#allocation4], 0
      %s18 = sshll.u32 %s0, 4
      %s19 = int_to_ptr.hbm [resolvable:$true] %s18
      %s20 = sshll.u32 [#allocation3], 4
      %s21 = int_to_ptr.vmem [resolvable:$true] %s20
      %26 = dma.hbm_to_vmem [thread:$0]  %s19, 256, %s21, [#allocation4], 128, 128, 8
    $region5: #{tpu_custom_call.1} parent=1 // pred_fallthru
      _
    // Predicated region
    $region6: #{tpu_custom_call.1} parent=1 // pred_check
      _
    $region7: #{tpu_custom_call.1} parent=1 // pred_check_branch
      %28 = sbr.rel (0) target = $region9
    $region8: #{tpu_custom_call.1} parent=1 // pred_region
      %30 = vsyncadd [#allocation8], 0
      %s31 = sshll.u32 %s1, 4
      %s32 = int_to_ptr.hbm [resolvable:$true] %s31
      %s33 = sshll.u32 [#allocation7], 4
      %s34 = int_to_ptr.vmem [resolvable:$true] %s33
      %39 = dma.hbm_to_vmem [thread:$0]  %s32, 1024, %s34, [#allocation8], 64, 64, 4
    $region9: #{tpu_custom_call.1} parent=1 // pred_fallthru
      _
    // Predicated region
    $region10: #{tpu_custom_call.1} parent=1 // pred_check
      _
    $region11: #{tpu_custom_call.1} parent=1 // pred_check_branch
      %41 = sbr.rel (0) target = $region13
    $region12: #{tpu_custom_call.1} parent=1 // pred_region
      _
    $region13: #{tpu_custom_call.1} parent=1 // pred_fallthru
      _
    // Predicated region
    $region14: #{tpu_custom_call.1} parent=1 // pred_check
      _
    $region15: #{tpu_custom_call.1} parent=1 // pred_check_branch
      %43 = sbr.rel (0) target = $region17
    $region16: #{tpu_custom_call.1} parent=1 // pred_region
      %45 = dma.done [#allocation4], 256
    $region17: #{tpu_custom_call.1} parent=1 // pred_fallthru
      _
    // Predicated region
    $region18: #{tpu_custom_call.1} parent=1 // pred_check
      _
    $region19: #{tpu_custom_call.1} parent=1 // pred_check_branch
      %47 = sbr.rel (0) target = $region21
    $region20: #{tpu_custom_call.1} parent=1 // pred_region
      %49 = dma.done [#allocation8], 1024
    $region21: #{tpu_custom_call.1} parent=1 // pred_fallthru
      _
    %v51 = vld [vmem:[#allocation3] sm:$0xff]
    %v52 = vld [vmem:[#allocation3 + $0x8] sm:$0xff]
    %vm53 = vcmp.gt.s32.totalorder %v51, 0
    %vm54 = vcmp.gt.s32.totalorder %v52, 0
    %v55 = vsel %vm53, 1, 0
    %v56 = vsel %vm54, 1, 0
    %v57 = vcvt.s32.f32 %v55
    %v58 = vcvt.s32.f32 %v56
    %vm59 = vcmask 130048
    %v60 = vsel %vm59, %v57, 0.0
    %61 = vadd.xlane.f32.xlu0 %v60
    %v62 = vpop.xlane.xlu0 %61
    %v63 = vsel %vm59, %v58, 0.0
    %64 = vadd.xlane.f32.xlu0 %v63
    %v65 = vpop.xlane.xlu0 %64
    %v66 = vsel %vm53, %v51, 4294967295
    %v67 = vsel %vm54, %v52, 4294967295
    %v68 = vlaneseq
    %v69 = vand.u32 %v68, 127
    %v70 = vperm.slane %v66, 0
    %v71 = vlaneseq
    %v72 = vshrl.u32 %v71, 7
    %74 = vset.pattern.permute.xlu0 %v72
    %75 = vperm.xlu0 %74, %v70
    %v76 = vpop.permute.xlu0 %75
    %v77 = vperm.slane %v66, 1
    %v78 = vlaneseq
    %v79 = vshrl.u32 %v78, 7
    %81 = vset.pattern.permute.xlu0 %v79
    %82 = vperm.xlu0 %81, %v77
    %v83 = vpop.permute.xlu0 %82
    %v84 = vperm.slane %v66, 2
    %v85 = vlaneseq
    %v86 = vshrl.u32 %v85, 7
    %88 = vset.pattern.permute.xlu0 %v86
    %89 = vperm.xlu0 %88, %v84
    %v90 = vpop.permute.xlu0 %89
    %v91 = vperm.slane %v66, 3
    %v92 = vlaneseq
    %v93 = vshrl.u32 %v92, 7
    %95 = vset.pattern.permute.xlu0 %v93
    %96 = vperm.xlu0 %95, %v91
    %v97 = vpop.permute.xlu0 %96
    %v98 = vperm.slane %v66, 4
    %v99 = vlaneseq
    %v100 = vshrl.u32 %v99, 7
    %102 = vset.pattern.permute.xlu0 %v100
    %103 = vperm.xlu0 %102, %v98
    %v104 = vpop.permute.xlu0 %103
    %v105 = vperm.slane %v66, 5
    %v106 = vlaneseq
    %v107 = vshrl.u32 %v106, 7
    %109 = vset.pattern.permute.xlu0 %v107
    %110 = vperm.xlu0 %109, %v105
    %v111 = vpop.permute.xlu0 %110
    %v112 = vperm.slane %v66, 6
    %v113 = vlaneseq
    %v114 = vshrl.u32 %v113, 7
    %116 = vset.pattern.permute.xlu0 %v114
    %117 = vperm.xlu0 %116, %v112
    %v118 = vpop.permute.xlu0 %117
    %v119 = vperm.slane %v66, 7
    %v120 = vlaneseq
    %v121 = vshrl.u32 %v120, 7
    %123 = vset.pattern.permute.xlu0 %v121
    %124 = vperm.xlu0 %123, %v119
    %v125 = vpop.permute.xlu0 %124
    %v126 = vperm.slane %v67, 0
    %v127 = vlaneseq
    %v128 = vshrl.u32 %v127, 7
    %130 = vset.pattern.permute.xlu0 %v128
    %131 = vperm.xlu0 %130, %v126
    %v132 = vpop.permute.xlu0 %131
    %v133 = vperm.slane %v67, 1
    %v134 = vlaneseq
    %v135 = vshrl.u32 %v134, 7
    %137 = vset.pattern.permute.xlu0 %v135
    %138 = vperm.xlu0 %137, %v133
    %v139 = vpop.permute.xlu0 %138
    %v140 = vperm.slane %v67, 2
    %v141 = vlaneseq
    %v142 = vshrl.u32 %v141, 7
    %144 = vset.pattern.permute.xlu0 %v142
    %145 = vperm.xlu0 %144, %v140
    %v146 = vpop.permute.xlu0 %145
    %v147 = vperm.slane %v67, 3
    %v148 = vlaneseq
    %v149 = vshrl.u32 %v148, 7
    %151 = vset.pattern.permute.xlu0 %v149
    %152 = vperm.xlu0 %151, %v147
    %v153 = vpop.permute.xlu0 %152
    %v154 = vperm.slane %v67, 4
    %v155 = vlaneseq
    %v156 = vshrl.u32 %v155, 7
    %158 = vset.pattern.permute.xlu0 %v156
    %159 = vperm.xlu0 %158, %v154
    %v160 = vpop.permute.xlu0 %159
    %v161 = vperm.slane %v67, 5
    %v162 = vlaneseq
    %v163 = vshrl.u32 %v162, 7
    %165 = vset.pattern.permute.xlu0 %v163
    %166 = vperm.xlu0 %165, %v161
    %v167 = vpop.permute.xlu0 %166
    %v168 = vperm.slane %v67, 6
    %v169 = vlaneseq
    %v170 = vshrl.u32 %v169, 7
    %172 = vset.pattern.permute.xlu0 %v170
    %173 = vperm.xlu0 %172, %v168
    %v174 = vpop.permute.xlu0 %173
    %v175 = vperm.slane %v67, 7
    %v176 = vlaneseq
    %v177 = vshrl.u32 %v176, 7
    %179 = vset.pattern.permute.xlu0 %v177
    %180 = vperm.xlu0 %179, %v175
    %v181 = vpop.permute.xlu0 %180
    %vm182 = vcmp.eq.s32.totalorder %v76, %v69
    %vm183 = vcmp.eq.s32.totalorder %v83, %v69
    %vm184 = vcmp.eq.s32.totalorder %v90, %v69
    %vm185 = vcmp.eq.s32.totalorder %v97, %v69
    %vm186 = vcmp.eq.s32.totalorder %v104, %v69
    %vm187 = vcmp.eq.s32.totalorder %v111, %v69
    %vm188 = vcmp.eq.s32.totalorder %v118, %v69
    %vm189 = vcmp.eq.s32.totalorder %v125, %v69
    %vm190 = vcmp.eq.s32.totalorder %v132, %v69
    %vm191 = vcmp.eq.s32.totalorder %v139, %v69
    %vm192 = vcmp.eq.s32.totalorder %v146, %v69
    %vm193 = vcmp.eq.s32.totalorder %v153, %v69
    %vm194 = vcmp.eq.s32.totalorder %v160, %v69
    %vm195 = vcmp.eq.s32.totalorder %v167, %v69
    %vm196 = vcmp.eq.s32.totalorder %v174, %v69
    %vm197 = vcmp.eq.s32.totalorder %v181, %v69
    %v198 = vsel %vm182, 1, 0
    %v199 = vsel %vm183, 1, 0
    %v200 = vsel %vm184, 1, 0
    %v201 = vsel %vm185, 1, 0
    %v202 = vsel %vm186, 1, 0
    %v203 = vsel %vm187, 1, 0
    %v204 = vsel %vm188, 1, 0
    %v205 = vsel %vm189, 1, 0
    %v206 = vsel %vm190, 1, 0
    %v207 = vsel %vm191, 1, 0
    %v208 = vsel %vm192, 1, 0
    %v209 = vsel %vm193, 1, 0
    %v210 = vsel %vm194, 1, 0
    %v211 = vsel %vm195, 1, 0
    %v212 = vsel %vm196, 1, 0
    %v213 = vsel %vm197, 1, 0
    %v214 = vcvt.s32.f32 %v198
    %v215 = vcvt.s32.f32 %v199
    %v216 = vcvt.s32.f32 %v200
    %v217 = vcvt.s32.f32 %v201
    %v218 = vcvt.s32.f32 %v202
    %v219 = vcvt.s32.f32 %v203
    %v220 = vcvt.s32.f32 %v204
    %v221 = vcvt.s32.f32 %v205
    %v222 = vcvt.s32.f32 %v206
    %v223 = vcvt.s32.f32 %v207
    %v224 = vcvt.s32.f32 %v208
    %v225 = vcvt.s32.f32 %v209
    %v226 = vcvt.s32.f32 %v210
    %v227 = vcvt.s32.f32 %v211
    %v228 = vcvt.s32.f32 %v212
    %v229 = vcvt.s32.f32 %v213
    %v230 = vrot.slane %v214, 4
    %v231 = vadd.f32 %v214, %v230
    %v232 = vrot.slane %v231, 2
    %v233 = vadd.f32 %v231, %v232
    %v234 = vrot.slane %v233, 1
    %v235 = vadd.f32 %v233, %v234
    %v236 = vrot.slane %v215, 4
    %v237 = vadd.f32 %v215, %v236
    %v238 = vrot.slane %v237, 2
    %v239 = vadd.f32 %v237, %v238
    %v240 = vrot.slane %v239, 1
    %v241 = vadd.f32 %v239, %v240
    %v242 = vrot.slane %v216, 4
    %v243 = vadd.f32 %v216, %v242
    %v244 = vrot.slane %v243, 2
    %v245 = vadd.f32 %v243, %v244
    %v246 = vrot.slane %v245, 1
    %v247 = vadd.f32 %v245, %v246
    %v248 = vrot.slane %v217, 4
    %v249 = vadd.f32 %v217, %v248
    %v250 = vrot.slane %v249, 2
    %v251 = vadd.f32 %v249, %v250
    %v252 = vrot.slane %v251, 1
    %v253 = vadd.f32 %v251, %v252
    %v254 = vrot.slane %v218, 4
    %v255 = vadd.f32 %v218, %v254
    %v256 = vrot.slane %v255, 2
    %v257 = vadd.f32 %v255, %v256
    %v258 = vrot.slane %v257, 1
    %v259 = vadd.f32 %v257, %v258
    %v260 = vrot.slane %v219, 4
    %v261 = vadd.f32 %v219, %v260
    %v262 = vrot.slane %v261, 2
    %v263 = vadd.f32 %v261, %v262
    %v264 = vrot.slane %v263, 1
    %v265 = vadd.f32 %v263, %v264
    %v266 = vrot.slane %v220, 4
    %v267 = vadd.f32 %v220, %v266
    %v268 = vrot.slane %v267, 2
    %v269 = vadd.f32 %v267, %v268
    %v270 = vrot.slane %v269, 1
    %v271 = vadd.f32 %v269, %v270
    %v272 = vrot.slane %v221, 4
    %v273 = vadd.f32 %v221, %v272
    %v274 = vrot.slane %v273, 2
    %v275 = vadd.f32 %v273, %v274
    %v276 = vrot.slane %v275, 1
    %v277 = vadd.f32 %v275, %v276
    %v278 = vrot.slane %v222, 4
    %v279 = vadd.f32 %v222, %v278
    %v280 = vrot.slane %v279, 2
    %v281 = vadd.f32 %v279, %v280
    %v282 = vrot.slane %v281, 1
    %v283 = vadd.f32 %v281, %v282
    %v284 = vrot.slane %v223, 4
    %v285 = vadd.f32 %v223, %v284
    %v286 = vrot.slane %v285, 2
    %v287 = vadd.f32 %v285, %v286
    %v288 = vrot.slane %v287, 1
    %v289 = vadd.f32 %v287, %v288
    %v290 = vrot.slane %v224, 4
    %v291 = vadd.f32 %v224, %v290
    %v292 = vrot.slane %v291, 2
    %v293 = vadd.f32 %v291, %v292
    %v294 = vrot.slane %v293, 1
    %v295 = vadd.f32 %v293, %v294
    %v296 = vrot.slane %v225, 4
    %v297 = vadd.f32 %v225, %v296
    %v298 = vrot.slane %v297, 2
    %v299 = vadd.f32 %v297, %v298
    %v300 = vrot.slane %v299, 1
    %v301 = vadd.f32 %v299, %v300
    %v302 = vrot.slane %v226, 4
    %v303 = vadd.f32 %v226, %v302
    %v304 = vrot.slane %v303, 2
    %v305 = vadd.f32 %v303, %v304
    %v306 = vrot.slane %v305, 1
    %v307 = vadd.f32 %v305, %v306
    %v308 = vrot.slane %v227, 4
    %v309 = vadd.f32 %v227, %v308
    %v310 = vrot.slane %v309, 2
    %v311 = vadd.f32 %v309, %v310
    %v312 = vrot.slane %v311, 1
    %v313 = vadd.f32 %v311, %v312
    %v314 = vrot.slane %v228, 4
    %v315 = vadd.f32 %v228, %v314
    %v316 = vrot.slane %v315, 2
    %v317 = vadd.f32 %v315, %v316
    %v318 = vrot.slane %v317, 1
    %v319 = vadd.f32 %v317, %v318
    %v320 = vrot.slane %v229, 4
    %v321 = vadd.f32 %v229, %v320
    %v322 = vrot.slane %v321, 2
    %v323 = vadd.f32 %v321, %v322
    %v324 = vrot.slane %v323, 1
    %v325 = vadd.f32 %v323, %v324
    %v326 = vadd.f32 %v235, 0.0
    %v327 = vadd.f32 %v241, 0.0
    %v328 = vadd.f32 %v247, 0.0
    %v329 = vadd.f32 %v253, 0.0
    %v330 = vadd.f32 %v259, 0.0
    %v331 = vadd.f32 %v265, 0.0
    %v332 = vadd.f32 %v271, 0.0
    %v333 = vadd.f32 %v277, 0.0
    %v334 = vadd.f32 %v283, 0.0
    %v335 = vadd.f32 %v289, 0.0
    %v336 = vadd.f32 %v295, 0.0
    %v337 = vadd.f32 %v301, 0.0
    %v338 = vadd.f32 %v307, 0.0
    %v339 = vadd.f32 %v313, 0.0
    %v340 = vadd.f32 %v319, 0.0
    %v341 = vadd.f32 %v325, 0.0
    %v342 = vlaneseq
    %v343 = vshrl.u32 %v342, 7
    %v344 = vadd.s32 %v343, 8
    %345 = vset.pattern.permute.xlu0 %v344
    %346 = vperm.xlu0 %345, %v70
    %v347 = vpop.permute.xlu0 %346
    %v348 = vlaneseq
    %v349 = vshrl.u32 %v348, 7
    %v350 = vadd.s32 %v349, 8
    %351 = vset.pattern.permute.xlu0 %v350
    %352 = vperm.xlu0 %351, %v77
    %v353 = vpop.permute.xlu0 %352
    %v354 = vlaneseq
    %v355 = vshrl.u32 %v354, 7
    %v356 = vadd.s32 %v355, 8
    %357 = vset.pattern.permute.xlu0 %v356
    %358 = vperm.xlu0 %357, %v84
    %v359 = vpop.permute.xlu0 %358
    %v360 = vlaneseq
    %v361 = vshrl.u32 %v360, 7
    %v362 = vadd.s32 %v361, 8
    %363 = vset.pattern.permute.xlu0 %v362
    %364 = vperm.xlu0 %363, %v91
    %v365 = vpop.permute.xlu0 %364
    %v366 = vlaneseq
    %v367 = vshrl.u32 %v366, 7
    %v368 = vadd.s32 %v367, 8
    %369 = vset.pattern.permute.xlu0 %v368
    %370 = vperm.xlu0 %369, %v98
    %v371 = vpop.permute.xlu0 %370
    %v372 = vlaneseq
    %v373 = vshrl.u32 %v372, 7
    %v374 = vadd.s32 %v373, 8
    %375 = vset.pattern.permute.xlu0 %v374
    %376 = vperm.xlu0 %375, %v105
    %v377 = vpop.permute.xlu0 %376
    %v378 = vlaneseq
    %v379 = vshrl.u32 %v378, 7
    %v380 = vadd.s32 %v379, 8
    %381 = vset.pattern.permute.xlu0 %v380
    %382 = vperm.xlu0 %381, %v112
    %v383 = vpop.permute.xlu0 %382
    %v384 = vlaneseq
    %v385 = vshrl.u32 %v384, 7
    %v386 = vadd.s32 %v385, 8
    %387 = vset.pattern.permute.xlu0 %v386
    %388 = vperm.xlu0 %387, %v119
    %v389 = vpop.permute.xlu0 %388
    %v390 = vlaneseq
    %v391 = vshrl.u32 %v390, 7
    %v392 = vadd.s32 %v391, 8
    %393 = vset.pattern.permute.xlu0 %v392
    %394 = vperm.xlu0 %393, %v126
    %v395 = vpop.permute.xlu0 %394
    %v396 = vlaneseq
    %v397 = vshrl.u32 %v396, 7
    %v398 = vadd.s32 %v397, 8
    %399 = vset.pattern.permute.xlu0 %v398
    %400 = vperm.xlu0 %399, %v133
    %v401 = vpop.permute.xlu0 %400
    %v402 = vlaneseq
    %v403 = vshrl.u32 %v402, 7
    %v404 = vadd.s32 %v403, 8
    %405 = vset.pattern.permute.xlu0 %v404
    %406 = vperm.xlu0 %405, %v140
    %v407 = vpop.permute.xlu0 %406
    %v408 = vlaneseq
    %v409 = vshrl.u32 %v408, 7
    %v410 = vadd.s32 %v409, 8
    %411 = vset.pattern.permute.xlu0 %v410
    %412 = vperm.xlu0 %411, %v147
    %v413 = vpop.permute.xlu0 %412
    %v414 = vlaneseq
    %v415 = vshrl.u32 %v414, 7
    %v416 = vadd.s32 %v415, 8
    %417 = vset.pattern.permute.xlu0 %v416
    %418 = vperm.xlu0 %417, %v154
    %v419 = vpop.permute.xlu0 %418
    %v420 = vlaneseq
    %v421 = vshrl.u32 %v420, 7
    %v422 = vadd.s32 %v421, 8
    %423 = vset.pattern.permute.xlu0 %v422
    %424 = vperm.xlu0 %423, %v161
    %v425 = vpop.permute.xlu0 %424
    %v426 = vlaneseq
    %v427 = vshrl.u32 %v426, 7
    %v428 = vadd.s32 %v427, 8
    %429 = vset.pattern.permute.xlu0 %v428
    %430 = vperm.xlu0 %429, %v168
    %v431 = vpop.permute.xlu0 %430
    %v432 = vlaneseq
    %v433 = vshrl.u32 %v432, 7
    %v434 = vadd.s32 %v433, 8
    %435 = vset.pattern.permute.xlu0 %v434
    %436 = vperm.xlu0 %435, %v175
    %v437 = vpop.permute.xlu0 %436
    %vm438 = vcmp.eq.s32.totalorder %v347, %v69
    %vm439 = vcmp.eq.s32.totalorder %v353, %v69
    %vm440 = vcmp.eq.s32.totalorder %v359, %v69
    %vm441 = vcmp.eq.s32.totalorder %v365, %v69
    %vm442 = vcmp.eq.s32.totalorder %v371, %v69
    %vm443 = vcmp.eq.s32.totalorder %v377, %v69
    %vm444 = vcmp.eq.s32.totalorder %v383, %v69
    %vm445 = vcmp.eq.s32.totalorder %v389, %v69
    %vm446 = vcmp.eq.s32.totalorder %v395, %v69
    %vm447 = vcmp.eq.s32.totalorder %v401, %v69
    %vm448 = vcmp.eq.s32.totalorder %v407, %v69
    %vm449 = vcmp.eq.s32.totalorder %v413, %v69
    %vm450 = vcmp.eq.s32.totalorder %v419, %v69
    %vm451 = vcmp.eq.s32.totalorder %v425, %v69
    %vm452 = vcmp.eq.s32.totalorder %v431, %v69
    %vm453 = vcmp.eq.s32.totalorder %v437, %v69
    %v454 = vsel %vm438, 1, 0
    %v455 = vsel %vm439, 1, 0
    %v456 = vsel %vm440, 1, 0
    %v457 = vsel %vm441, 1, 0
    %v458 = vsel %vm442, 1, 0
    %v459 = vsel %vm443, 1, 0
    %v460 = vsel %vm444, 1, 0
    %v461 = vsel %vm445, 1, 0
    %v462 = vsel %vm446, 1, 0
    %v463 = vsel %vm447, 1, 0
    %v464 = vsel %vm448, 1, 0
    %v465 = vsel %vm449, 1, 0
    %v466 = vsel %vm450, 1, 0
    %v467 = vsel %vm451, 1, 0
    %v468 = vsel %vm452, 1, 0
    %v469 = vsel %vm453, 1, 0
    %v470 = vcvt.s32.f32 %v454
    %v471 = vcvt.s32.f32 %v455
    %v472 = vcvt.s32.f32 %v456
    %v473 = vcvt.s32.f32 %v457
    %v474 = vcvt.s32.f32 %v458
    %v475 = vcvt.s32.f32 %v459
    %v476 = vcvt.s32.f32 %v460
    %v477 = vcvt.s32.f32 %v461
    %v478 = vcvt.s32.f32 %v462
    %v479 = vcvt.s32.f32 %v463
    %v480 = vcvt.s32.f32 %v464
    %v481 = vcvt.s32.f32 %v465
    %v482 = vcvt.s32.f32 %v466
    %v483 = vcvt.s32.f32 %v467
    %v484 = vcvt.s32.f32 %v468
    %v485 = vcvt.s32.f32 %v469
    %v486 = vrot.slane %v470, 4
    %v487 = vadd.f32 %v470, %v486
    %v488 = vrot.slane %v487, 2
    %v489 = vadd.f32 %v487, %v488
    %v490 = vrot.slane %v489, 1
    %v491 = vadd.f32 %v489, %v490
    %v492 = vrot.slane %v471, 4
    %v493 = vadd.f32 %v471, %v492
    %v494 = vrot.slane %v493, 2
    %v495 = vadd.f32 %v493, %v494
    %v496 = vrot.slane %v495, 1
    %v497 = vadd.f32 %v495, %v496
    %v498 = vrot.slane %v472, 4
    %v499 = vadd.f32 %v472, %v498
    %v500 = vrot.slane %v499, 2
    %v501 = vadd.f32 %v499, %v500
    %v502 = vrot.slane %v501, 1
    %v503 = vadd.f32 %v501, %v502
    %v504 = vrot.slane %v473, 4
    %v505 = vadd.f32 %v473, %v504
    %v506 = vrot.slane %v505, 2
    %v507 = vadd.f32 %v505, %v506
    %v508 = vrot.slane %v507, 1
    %v509 = vadd.f32 %v507, %v508
    %v510 = vrot.slane %v474, 4
    %v511 = vadd.f32 %v474, %v510
    %v512 = vrot.slane %v511, 2
    %v513 = vadd.f32 %v511, %v512
    %v514 = vrot.slane %v513, 1
    %v515 = vadd.f32 %v513, %v514
    %v516 = vrot.slane %v475, 4
    %v517 = vadd.f32 %v475, %v516
    %v518 = vrot.slane %v517, 2
    %v519 = vadd.f32 %v517, %v518
    %v520 = vrot.slane %v519, 1
    %v521 = vadd.f32 %v519, %v520
    %v522 = vrot.slane %v476, 4
    %v523 = vadd.f32 %v476, %v522
    %v524 = vrot.slane %v523, 2
    %v525 = vadd.f32 %v523, %v524
    %v526 = vrot.slane %v525, 1
    %v527 = vadd.f32 %v525, %v526
    %v528 = vrot.slane %v477, 4
    %v529 = vadd.f32 %v477, %v528
    %v530 = vrot.slane %v529, 2
    %v531 = vadd.f32 %v529, %v530
    %v532 = vrot.slane %v531, 1
    %v533 = vadd.f32 %v531, %v532
    %v534 = vrot.slane %v478, 4
    %v535 = vadd.f32 %v478, %v534
    %v536 = vrot.slane %v535, 2
    %v537 = vadd.f32 %v535, %v536
    %v538 = vrot.slane %v537, 1
    %v539 = vadd.f32 %v537, %v538
    %v540 = vrot.slane %v479, 4
    %v541 = vadd.f32 %v479, %v540
    %v542 = vrot.slane %v541, 2
    %v543 = vadd.f32 %v541, %v542
    %v544 = vrot.slane %v543, 1
    %v545 = vadd.f32 %v543, %v544
    %v546 = vrot.slane %v480, 4
    %v547 = vadd.f32 %v480, %v546
    %v548 = vrot.slane %v547, 2
    %v549 = vadd.f32 %v547, %v548
    %v550 = vrot.slane %v549, 1
    %v551 = vadd.f32 %v549, %v550
    %v552 = vrot.slane %v481, 4
    %v553 = vadd.f32 %v481, %v552
    %v554 = vrot.slane %v553, 2
    %v555 = vadd.f32 %v553, %v554
    %v556 = vrot.slane %v555, 1
    %v557 = vadd.f32 %v555, %v556
    %v558 = vrot.slane %v482, 4
    %v559 = vadd.f32 %v482, %v558
    %v560 = vrot.slane %v559, 2
    %v561 = vadd.f32 %v559, %v560
    %v562 = vrot.slane %v561, 1
    %v563 = vadd.f32 %v561, %v562
    %v564 = vrot.slane %v483, 4
    %v565 = vadd.f32 %v483, %v564
    %v566 = vrot.slane %v565, 2
    %v567 = vadd.f32 %v565, %v566
    %v568 = vrot.slane %v567, 1
    %v569 = vadd.f32 %v567, %v568
    %v570 = vrot.slane %v484, 4
    %v571 = vadd.f32 %v484, %v570
    %v572 = vrot.slane %v571, 2
    %v573 = vadd.f32 %v571, %v572
    %v574 = vrot.slane %v573, 1
    %v575 = vadd.f32 %v573, %v574
    %v576 = vrot.slane %v485, 4
    %v577 = vadd.f32 %v485, %v576
    %v578 = vrot.slane %v577, 2
    %v579 = vadd.f32 %v577, %v578
    %v580 = vrot.slane %v579, 1
    %v581 = vadd.f32 %v579, %v580
    %v582 = vadd.f32 %v326, %v491
    %v583 = vadd.f32 %v327, %v497
    %v584 = vadd.f32 %v328, %v503
    %v585 = vadd.f32 %v329, %v509
    %v586 = vadd.f32 %v330, %v515
    %v587 = vadd.f32 %v331, %v521
    %v588 = vadd.f32 %v332, %v527
    %v589 = vadd.f32 %v333, %v533
    %v590 = vadd.f32 %v334, %v539
    %v591 = vadd.f32 %v335, %v545
    %v592 = vadd.f32 %v336, %v551
    %v593 = vadd.f32 %v337, %v557
    %v594 = vadd.f32 %v338, %v563
    %v595 = vadd.f32 %v339, %v569
    %v596 = vadd.f32 %v340, %v575
    %v597 = vadd.f32 %v341, %v581
    %v598 = vpack.c.bf16 %v582, %v582
    %v599 = vpack.c.bf16 %v583, %v583
    %v600 = vpack.c.bf16 %v584, %v584
    %v601 = vpack.c.bf16 %v585, %v585
    %v602 = vpack.c.bf16 %v586, %v586
    %v603 = vpack.c.bf16 %v587, %v587
    %v604 = vpack.c.bf16 %v588, %v588
    %v605 = vpack.c.bf16 %v589, %v589
    %v606 = vpack.c.bf16 %v590, %v590
    %v607 = vpack.c.bf16 %v591, %v591
    %v608 = vpack.c.bf16 %v592, %v592
    %v609 = vpack.c.bf16 %v593, %v593
    %v610 = vpack.c.bf16 %v594, %v594
    %v611 = vpack.c.bf16 %v595, %v595
    %v612 = vpack.c.bf16 %v596, %v596
    %v613 = vpack.c.bf16 %v597, %v597
    %v614 = vld [vmem:[#allocation7] sm:$0xf]
    %v615 = vld [vmem:[#allocation7 + $0x4] sm:$0xf]
    %v616 = vld [vmem:[#allocation7 + $0x8] sm:$0xf]
    %v617 = vld [vmem:[#allocation7 + $0xc] sm:$0xf]
    %v618 = vld [vmem:[#allocation7 + $0x10] sm:$0xf]
    %v619 = vld [vmem:[#allocation7 + $0x14] sm:$0xf]
    %v620 = vld [vmem:[#allocation7 + $0x18] sm:$0xf]
    %v621 = vld [vmem:[#allocation7 + $0x1c] sm:$0xf]
    %v622 = vld [vmem:[#allocation7 + $0x20] sm:$0xf]
    %v623 = vld [vmem:[#allocation7 + $0x24] sm:$0xf]
    %v624 = vld [vmem:[#allocation7 + $0x28] sm:$0xf]
    %v625 = vld [vmem:[#allocation7 + $0x2c] sm:$0xf]
    %v626 = vld [vmem:[#allocation7 + $0x30] sm:$0xf]
    %v627 = vld [vmem:[#allocation7 + $0x34] sm:$0xf]
    %v628 = vld [vmem:[#allocation7 + $0x38] sm:$0xf]
    %v629 = vld [vmem:[#allocation7 + $0x3c] sm:$0xf]
    %v646 = vunpack.c.l.b16 %v598
    %v647 = vunpack.c.l.b16 %v599
    %v648 = vunpack.c.l.b16 %v600
    %v649 = vunpack.c.l.b16 %v601
    %v650 = vunpack.c.l.b16 %v602
    %v651 = vunpack.c.l.b16 %v603
    %v652 = vunpack.c.l.b16 %v604
    %v653 = vunpack.c.l.b16 %v605
    %v654 = vunpack.c.l.b16 %v606
    %v655 = vunpack.c.l.b16 %v607
    %v656 = vunpack.c.l.b16 %v608
    %v657 = vunpack.c.l.b16 %v609
    %v658 = vunpack.c.l.b16 %v610
    %v659 = vunpack.c.l.b16 %v611
    %v660 = vunpack.c.l.b16 %v612
    %v661 = vunpack.c.l.b16 %v613
    %vm662 = vcmask 1041409
    %v663 = vsel %vm662, %v647, %v646
    %vm664 = vcmask 1042434
    %v665 = vsel %vm664, %v648, %v663
    %vm666 = vcmask 1043459
    %v667 = vsel %vm666, %v649, %v665
    %vm668 = vcmask 1044484
    %v669 = vsel %vm668, %v650, %v667
    %vm670 = vcmask 1045509
    %v671 = vsel %vm670, %v651, %v669
    %vm672 = vcmask 1046534
    %v673 = vsel %vm672, %v652, %v671
    %vm674 = vcmask 1047559
    %v675 = vsel %vm674, %v653, %v673
    %v676 = vsel %vm662, %v655, %v654
    %v677 = vsel %vm664, %v656, %v676
    %v678 = vsel %vm666, %v657, %v677
    %v679 = vsel %vm668, %v658, %v678
    %v680 = vsel %vm670, %v659, %v679
    %v681 = vsel %vm672, %v660, %v680
    %v682 = vsel %vm674, %v661, %v681
    %v683 = vpack.c.b16 %v682, %v675
    %v701 = vunpack.c.l.b16 %v614
    %v702 = vunpack.c.l.b16 %v615
    %v703 = vunpack.c.l.b16 %v616
    %v704 = vunpack.c.l.b16 %v617
    %v705 = vunpack.c.l.b16 %v618
    %v706 = vunpack.c.l.b16 %v619
    %v707 = vunpack.c.l.b16 %v620
    %v708 = vunpack.c.l.b16 %v621
    %v709 = vunpack.c.l.b16 %v622
    %v710 = vunpack.c.l.b16 %v623
    %v711 = vunpack.c.l.b16 %v624
    %v712 = vunpack.c.l.b16 %v625
    %v713 = vunpack.c.l.b16 %v626
    %v714 = vunpack.c.l.b16 %v627
    %v715 = vunpack.c.l.b16 %v628
    %v716 = vunpack.c.l.b16 %v629
    %v717 = vpack.c.b16 %v702, %v701
    %v718 = vpack.c.b16 %v704, %v703
    %v719 = vpack.c.b16 %v706, %v705
    %v720 = vpack.c.b16 %v708, %v707
    %v721 = vpack.c.b16 %v710, %v709
    %v722 = vpack.c.b16 %v712, %v711
    %v723 = vpack.c.b16 %v714, %v713
    %v724 = vpack.c.b16 %v716, %v715
    %733 = vmatpush.bf16.msra.mxu0 %v724
    %734 = vmatpush.bf16.msra.mxu0 %v723
    %735 = vmatpush.bf16.msra.mxu0 %v722
    %736 = vmatpush.bf16.msra.mxu0 %v721
    %737 = vmatpush.bf16.msra.mxu0 %v720
    %738 = vmatpush.bf16.msra.mxu0 %v719
    %739 = vmatpush.bf16.msra.mxu0 %v718
    %740 = vmatpush.bf16.msra.mxu0 %v717
    %741 = vmatmul.bf16.gmra.mxu0 %v683
    %v742 = vpop.f32.mrf.mxu0
    %v743 = vadd.f32 0.0, %v742
    %v744 = vpop.f32.mrf.mxu0
    %v745 = vadd.f32 0.0, %v744
    %746 = vdwg.mxu0
    %v747 = vmax.f32 %v62, 1.0
    %v748 = vmax.f32 %v65, 1.0
    %v749 = vrcp.pop %v747
    %v750 = vrcp.pop %v748
    %v751 = vmul.f32 %v743, %v749
    %v752 = vmul.f32 %v745, %v750
    %v753 = vld [vmem:[%s2] sm:$0x1]
    %v755 = vperm.slane %v753, 0
    %v757 = vadd.f32 %v751, %v755
    %v758 = vadd.f32 %v752, %v755
    %v759 = vtanh.pop %v757
    %v760 = vtanh.pop %v758
    %s761 = smul.u32 0, 16
    %s762 = scalar_lea.vmem [#allocation2], %s761
    %763 = vst [vmem:[%s762] sm:$0xff] %v759
    %764 = vst [vmem:[%s762 + $0x8] sm:$0xff] %v760
    %p765 = scmp.eq.s32.totalorder 0, 0
    // Predicated region
    $region22: #{tpu_custom_call.1} parent=1 // pred_check
      %p766 = pneg %p765
    $region23: #{tpu_custom_call.1} parent=1 // pred_check_branch
      %768 = sbr.rel (%p766) target = $region25
    $region24: #{tpu_custom_call.1} parent=1 // pred_region
      %v769 = vld [vmem:[#allocation2] sm:$0xff]
      %v770 = vld [vmem:[#allocation2 + $0x8] sm:$0xff]
      %v771 = vpack.c.bf16 %v769, %v769
      %v772 = vpack.c.bf16 %v770, %v770
      %773 = vmatpush.bf16.xpose.msra.mxu0 0
      %774 = vmatpush.bf16.xpose.msra.mxu0 0
      %775 = vmatpush.bf16.xpose.msra.mxu0 0
      %776 = vmatpush.bf16.xpose.msra.mxu0 0
      %777 = vmatpush.bf16.xpose.msra.mxu0 0
      %778 = vmatpush.bf16.xpose.msra.mxu0 0
      %779 = vmatpush.bf16.xpose.msra.mxu0 0
      %780 = vmatpush.bf16.xpose.msra.mxu0 %v772
      %781 = vmatmul.bf16.gmra.mxu0 %v771
      %v782 = vpop.f32.mrf.mxu0
      %v783 = vadd.f32 0.0, %v782
      %v784 = vpop.f32.mrf.mxu0
      %785 = vdwg.mxu0
      %v786 = vunpack.c.l.bf16 %v771
      %v787 = vunpack.c.l.bf16 %v772
      %v788 = vmul.f32 %v786, %v787
      %789 = vadd.xlane.f32.xlu0 %v788
      %v790 = vpop.xlane.xlu0 %789
      %vm791 = vcmask 64512
      %v792 = vsel %vm791, %v783, -inf
      %793 = vmax.xlane.f32.xlu0 %v792
      %v794 = vpop.xlane.xlu0 %793
      %v795 = vsub.f32 %v783, %v794
      %v796 = vmul.f32 %v795, 1.442695
      %v797 = vpow.pop %v796
      %v798 = vsel %vm791, %v797, 0.0
      %799 = vadd.xlane.f32.xlu0 %v798
      %v800 = vpop.xlane.xlu0 %799
      %v801 = vlog2.pop %v800
      %v802 = vmul.f32 %v801, 0.6931472
      %v803 = vadd.f32 %v794, %v802
      %v804 = vsub.f32 %v803, %v790
      %vm805 = vcmask 7168
      %v806 = vsel %vm805, %v804, 0.0
      %807 = vadd.xlane.f32.xlu0 %v806
      %v808 = vpop.xlane.xlu0 %807
      %v809 = vrot.slane %v808, 4
      %v810 = vadd.f32 %v808, %v809
      %v811 = vrot.slane %v810, 2
      %v812 = vadd.f32 %v810, %v811
      %v813 = vrot.slane %v812, 1
      %v814 = vadd.f32 %v812, %v813
      %s815 = vtos %v814
      %v816 = vrcp.pop 8.0
      %v817 = vmul.f32 8.0, %v816
      %v818 = vsub.f32 1.0, %v817
      %v819 = vmul.f32 %v816, %v818
      %v820 = vadd.f32 %v816, %v819
      %vm821 = vweird.f32 %v816
      %v822 = vsel %vm821, %v816, %v820
      %s823 = vtos %v822
      %s824 = smul.f32 %s815, %s823
      %s825 = scalar_lea.smem [#allocation10], 0
      %826 = sst [smem:[%s825]] %s824
      %827 = vst.msk [vmem:[#allocation9] sm:$0xff] %vm791, %v783
    $region25: #{tpu_custom_call.1} parent=1 // pred_fallthru
      _
    // Predicated region
    $region26: #{tpu_custom_call.1} parent=1 // pred_check
      _
    $region27: #{tpu_custom_call.1} parent=1 // pred_check_branch
      %829 = sbr.rel (0) target = $region29
    $region28: #{tpu_custom_call.1} parent=1 // pred_region
      %831 = vsyncadd [#allocation5], 0
      %s833 = sshll.u32 [#allocation9], 4
      %s834 = int_to_ptr.vmem [resolvable:$true] %s833
      %s835 = sshll.u32 %s3, 4
      %s836 = int_to_ptr.hbm [resolvable:$true] %s835
      %838 = dma.vmem_to_hbm [thread:$0]  %s834, 128, %s836, [#allocation5]
    $region29: #{tpu_custom_call.1} parent=1 // pred_fallthru
      _
    // Predicated region
    $region30: #{tpu_custom_call.1} parent=1 // pred_check
      _
    $region31: #{tpu_custom_call.1} parent=1 // pred_check_branch
      %840 = sbr.rel (0) target = $region33
    $region32: #{tpu_custom_call.1} parent=1 // pred_region
      %842 = vsyncadd [#allocation6], 0
      %s844 = sshll.u32 %s4, 4
      %s845 = int_to_ptr.hbm [resolvable:$true] %s844
      %847 = dma.smem_to_hbm [#allocation10], 16, %s845, [#allocation6]
    $region33: #{tpu_custom_call.1} parent=1 // pred_fallthru
      _
    // Predicated region
    $region34: #{tpu_custom_call.1} parent=1 // pred_check
      _
    $region35: #{tpu_custom_call.1} parent=1 // pred_check_branch
      %849 = sbr.rel (0) target = $region37
    $region36: #{tpu_custom_call.1} parent=1 // pred_region
      %851 = dma.done [#allocation5], 128
    $region37: #{tpu_custom_call.1} parent=1 // pred_fallthru
      _
    // Predicated region
    $region38: #{tpu_custom_call.1} parent=1 // pred_check
      _
    $region39: #{tpu_custom_call.1} parent=1 // pred_check_branch
      %853 = sbr.rel (0) target = $region41
    $region40: #{tpu_custom_call.1} parent=1 // pred_region
      %855 = dma.done [#allocation6], 16
    $region41: #{tpu_custom_call.1} parent=1 // pred_fallthru
      _
    %856 = sfence
    %857 = vsyncpa [#allocation4], 1
    %858 = vsyncpa [#allocation8], 1
    %859 = vsyncpa [#allocation5], 1
    %860 = vsyncpa [#allocation6], 1

</llo_original>
